<compile_context>
chip_gen: v7x
topology: tpu7x:2x2x1
jax: 0.10.0
libtpu: 0.0.40
codegen_flags: <defaults>
</compile_context>

<pallas_src>
import functools

import numpy as np
import jax
import jax.numpy as jnp
from jax.experimental import pallas as pl
from jax.experimental.pallas import tpu as pltpu


# ----------------------------------------------------------------------------
# Projection kernel: y = x @ W   (full-width 2-D matmul, bf16 out, f32 acc)
# ----------------------------------------------------------------------------
def _linear_kernel(x_ref, w_ref, o_ref):
    o_ref[0] = jnp.dot(x_ref[0], w_ref[...],
                       preferred_element_type=jnp.float32).astype(o_ref.dtype)


def _linear(x, w, block_rows):
    """x: [B, L, E] bf16, w: [E, N] bf16 -> [B, L, N] bf16."""
    B, L, E = x.shape
    N = w.shape[1]
    return pl.pallas_call(
        _linear_kernel,
        out_shape=jax.ShapeDtypeStruct((B, L, N), jnp.bfloat16),
        grid_spec=pltpu.PrefetchScalarGridSpec(
            num_scalar_prefetch=0,
            grid=(B, L // block_rows),
            in_specs=[
                pl.BlockSpec((1, block_rows, E), lambda b, r: (b, r, 0)),
                pl.BlockSpec((E, N), lambda b, r: (0, 0)),
            ],
            out_specs=pl.BlockSpec((1, block_rows, N), lambda b, r: (b, r, 0)),
        ),
        compiler_params=pltpu.CompilerParams(
            dimension_semantics=("parallel", "parallel")),
    )(x, w)


# ----------------------------------------------------------------------------
# Attention kernel: online-softmax attention + output proj + residual + LN
# ----------------------------------------------------------------------------
def _attn_kernel(q_ref, k_ref, v_ref, bias_ref, wo_ref, xq_ref, out_ref,
                 m_ref, l_ref, acc_ref, *, n_heads, k_dim, v_dim, eps):
    f32 = jnp.float32
    bf16 = jnp.bfloat16
    kv = pl.program_id(2)

    @pl.when(kv == 0)
    def _():
        m_ref[...] = jnp.full(m_ref.shape, -jnp.inf, f32)
        l_ref[...] = jnp.zeros(l_ref.shape, f32)
        acc_ref[...] = jnp.zeros(acc_ref.shape, f32)

    q = q_ref[0]                          # [bq, H*Dk] bf16 (scale folded in)
    k = k_ref[0]                          # [bk, H*Dk] bf16
    v = v_ref[0]                          # [bk, H*Dv] bf16
    bias = bias_ref[0].astype(f32)        # [bq, bk]  additive mask (-1e9 masked)

    # Per-head online softmax; heads are static lane slices of the flat
    # projections (pair heads per slice for 128-lane alignment at Dk=64 if
    # further tuning is needed).
    for h in range(n_heads):
        qs = slice(h * k_dim, (h + 1) * k_dim)
        vs = slice(h * v_dim, (h + 1) * v_dim)
        q_h = q[:, qs]                    # [bq, Dk] bf16
        k_h = k[:, qs]                    # [bk, Dk] bf16
        v_h = v[:, vs]                    # [bk, Dv] bf16

        s = jnp.einsum('qd,kd->qk', q_h, k_h,
                       preferred_element_type=f32) + bias      # [bq, bk] f32

        m_old = m_ref[h]                                         # [bq, 1]
        m_new = jnp.maximum(m_old, jnp.max(s, axis=-1, keepdims=True))
        alpha = jnp.exp(m_old - m_new)                           # [bq, 1]
        p = jnp.exp(s - m_new)                                   # [bq, bk] f32

        l_ref[h] = alpha * l_ref[h] + jnp.sum(p, axis=-1, keepdims=True)
        acc_ref[:, vs] = alpha * acc_ref[:, vs] + jnp.einsum(
            'qk,kd->qd', p.astype(bf16), v_h, preferred_element_type=f32)
        m_ref[h] = m_new

    @pl.when(kv == pl.num_programs(2) - 1)
    def _():
        # Normalize per head (EUP reciprocal), then one full-depth output
        # projection (K = H*Dv) -- no [H, bq, E] buffer, no head-sum.
        for h in range(n_heads):
            vs = slice(h * v_dim, (h + 1) * v_dim)
            acc_ref[:, vs] = acc_ref[:, vs] * pl.reciprocal(l_ref[h], approx=True)
        ctx = acc_ref[...].astype(bf16)                          # [bq, H*Dv]
        out = jnp.dot(ctx, wo_ref[...],
                      preferred_element_type=jnp.float32)        # [bq, E]

        # residual + LayerNorm (gamma=1, beta=0, biased variance)
        y = out + xq_ref[0].astype(jnp.float32)
        mean = jnp.mean(y, axis=-1, keepdims=True)
        var = jnp.mean(jnp.square(y - mean), axis=-1, keepdims=True)
        out_ref[0] = ((y - mean) * jax.lax.rsqrt(var + eps)).astype(out_ref.dtype)


def _pick_block(n, target, align):
    """Largest divisor of n that is <= target and a multiple of `align`.
    Falls back to the full extent (always a legal block) if none exists."""
    if n <= target:
        return n
    for d in range(target, align - 1, -1):
        if n % d == 0 and d % align == 0:
            return d
    return n


# ----------------------------------------------------------------------------
# Public wrapper (mirrors MultiHeadAttention.forward)
# ----------------------------------------------------------------------------
def multi_head_attention(input_Q, input_K, input_V, attn_mask,
                         w_q, w_k, w_v, w_o, *,
                         n_heads, k_dim, v_dim, eps=1e-5,
                         block_q=None, block_k=None, out_dtype=jnp.bfloat16):
    """attn_mask: [B, L_q, L_k] float 0/1 where 1.0 == masked position."""
    B, Lq, E = input_Q.shape
    Lk = input_K.shape[1]
    hdk = n_heads * k_dim
    hdv = n_heads * v_dim
    bf16 = jnp.bfloat16

    # bf16 HBM streams; softmax scale folded into W_Q.
    xq = input_Q.astype(bf16)
    xk = input_K.astype(bf16)
    xv = input_V.astype(bf16)
    wq = (w_q / np.sqrt(k_dim)).astype(bf16)
    wk = w_k.astype(bf16)
    wv = w_v.astype(bf16)
    wo = w_o.astype(bf16)

    # Additive mask bias (1.0 == masked -> -1e9); bf16 stream, single add in-kernel.
    bias = (attn_mask.astype(jnp.float32) * jnp.float32(-1e9)).astype(bf16)

    # ---- QKV projections (computed once; full-MXU-width 2-D matmuls) --------
    q_proj = _linear(xq, wq, _pick_block(Lq, 512, 8))   # [B, Lq, H*Dk] bf16
    k_proj = _linear(xk, wk, _pick_block(Lk, 512, 8))   # [B, Lk, H*Dk] bf16
    v_proj = _linear(xv, wv, _pick_block(Lk, 512, 8))   # [B, Lk, H*Dv] bf16

    # ---- attention core tiling (VMEM bounded independent of Lk) -------------
    if block_q is None:
        block_q = _pick_block(Lq, 256, 8)     # conservative for v7x's 64 MiB VMEM
    if block_k is None:
        block_k = _pick_block(Lk, 512, 128)   # lane-aligned kv / mask tiles
    assert Lq % block_q == 0 and Lk % block_k == 0
    nq, nk = Lq // block_q, Lk // block_k

    kernel = functools.partial(_attn_kernel, n_heads=n_heads,
                               k_dim=k_dim, v_dim=v_dim, eps=eps)

    flops = int(2 * B * Lq * Lk * (hdk + hdv)      # scores + context
                + 2 * B * Lq * hdv * E)            # output projection
    bytes_accessed = int(2 * (q_proj.size + xq.size + wo.size + bias.size
                              + nq * (k_proj.size + v_proj.size))
                         + jnp.dtype(out_dtype).itemsize * B * Lq * E)
    cost = pl.CostEstimate(flops=flops,
                           transcendentals=int(B * n_heads * Lq * Lk),
                           bytes_accessed=bytes_accessed)

    grid_spec = pltpu.PrefetchScalarGridSpec(
        num_scalar_prefetch=0,
        grid=(B, nq, nk),
        in_specs=[
            pl.BlockSpec((1, block_q, hdk), lambda b, q, k: (b, q, 0)),   # Q tile
            pl.BlockSpec((1, block_k, hdk), lambda b, q, k: (b, k, 0)),   # K tile
            pl.BlockSpec((1, block_k, hdv), lambda b, q, k: (b, k, 0)),   # V tile
            pl.BlockSpec((1, block_q, block_k), lambda b, q, k: (b, q, k)),  # mask bias
            pl.BlockSpec((hdv, E), lambda b, q, k: (0, 0)),               # W_O
            pl.BlockSpec((1, block_q, E), lambda b, q, k: (b, q, 0)),     # residual
        ],
        out_specs=pl.BlockSpec((1, block_q, E), lambda b, q, k: (b, q, 0)),
        scratch_shapes=[
            pltpu.VMEM((n_heads, block_q, 1), jnp.float32),   # m (running max)
            pltpu.VMEM((n_heads, block_q, 1), jnp.float32),   # l (running denom)
            pltpu.VMEM((block_q, hdv), jnp.float32),          # acc (flat context)
        ],
    )

    return pl.pallas_call(
        kernel,
        out_shape=jax.ShapeDtypeStruct((B, Lq, E), out_dtype),
        grid_spec=grid_spec,
        compiler_params=pltpu.CompilerParams(
            dimension_semantics=("parallel", "parallel", "arbitrary")),
        cost_estimate=cost,
    )(q_proj, k_proj, v_proj, bias, wo, xq)


# ----------------------------------------------------------------------------
# Pure-JAX f32 reference (mirrors the PyTorch module)
# ----------------------------------------------------------------------------
def _reference(input_Q, input_K, input_V, attn_mask, w_q, w_k, w_v, w_o,
               n_heads, k_dim, v_dim, eps=1e-5):
    B, Lq, E = input_Q.shape
    Q = (input_Q @ w_q).reshape(B, Lq, n_heads, k_dim).transpose(0, 2, 1, 3)
    K = (input_K @ w_k).reshape(B, -1, n_heads, k_dim).transpose(0, 2, 1, 3)
    V = (input_V @ w_v).reshape(B, -1, n_heads, v_dim).transpose(0, 2, 1, 3)
    scores = jnp.einsum("bhqd,bhkd->bhqk", Q, K) / np.sqrt(k_dim)
    scores = jnp.where(attn_mask[:, None, :, :] > 0.5, -1e9, scores)
    attn = jax.nn.softmax(scores, axis=-1)
    ctx = jnp.einsum("bhqk,bhkd->bhqd", attn, V)
    ctx = ctx.transpose(0, 2, 1, 3).reshape(B, Lq, n_heads * v_dim)
    out = ctx @ w_o
    y = out + input_Q
    mean = jnp.mean(y, axis=-1, keepdims=True)
    var = jnp.mean((y - mean) ** 2, axis=-1, keepdims=True)
    return (y - mean) / jnp.sqrt(var + eps)


if __name__ == "__main__":
    # Small, module-consistent shapes.
    B, L, E = 2, 8, 32
    n_heads, k_dim, v_dim = 4, 8, 8

    key = jax.random.PRNGKey(0)
    kq, kwq, kwk, kwv, kwo = jax.random.split(key, 5)

    input_Q = jax.random.normal(kq, (B, L, E), dtype=jnp.float32)
    input_K = input_Q   # self-attention
    input_V = input_Q

    # Deterministic synthetic parameters (nn.Linear weights, pre-transposed).
    w_q = jax.random.normal(kwq, (E, n_heads * k_dim), dtype=jnp.float32) * 0.1
    w_k = jax.random.normal(kwk, (E, n_heads * k_dim), dtype=jnp.float32) * 0.1
    w_v = jax.random.normal(kwv, (E, n_heads * v_dim), dtype=jnp.float32) * 0.1
    w_o = jax.random.normal(kwo, (n_heads * v_dim, E), dtype=jnp.float32) * 0.1

    # Causal mask (1.0 == masked), [B, L, L].
    causal = jnp.triu(jnp.ones((L, L), dtype=jnp.float32), k=1)
    attn_mask = jnp.broadcast_to(causal, (B, L, L))

    out = multi_head_attention(input_Q, input_K, input_V, attn_mask,
                               w_q, w_k, w_v, w_o,
                               n_heads=n_heads, k_dim=k_dim, v_dim=v_dim)
    out = jax.block_until_ready(out)

    ref = _reference(input_Q, input_K, input_V, attn_mask,
                     w_q, w_k, w_v, w_o, n_heads, k_dim, v_dim)
    # bf16 matmuls / bf16 output (f32 accumulation) vs the f32 reference.
    np.testing.assert_allclose(np.asarray(out, dtype=np.float32),
                               np.asarray(ref), rtol=5e-2, atol=5e-2)
    print("KERNEL_OK")
</pallas_src>

<mosaic_0001>
module attributes {stable_mosaic.version = 11 : i64} {
  func.func @_linear_kernel(%arg0: i32, %arg1: i32, %arg2: memref<1x8x32xbf16, #tpu.memory_space<vmem>>, %arg3: memref<32x32xbf16, #tpu.memory_space<vmem>>, %arg4: memref<1x8x32xbf16, #tpu.memory_space<vmem>>) attributes {dimension_semantics = [#tpu.dimension_semantics<parallel>, #tpu.dimension_semantics<parallel>], iteration_bounds = array<i64: 2, 1>, scalar_prefetch = 0 : i64, scratch_operands = 0 : i64, tpu.core_type = #tpu.core_type<tc>, window_params = [{transform_indices = @transform_0, window_bounds = array<i64: 1, 8, 32>}, {pipeline_mode = #tpu.pipeline_mode<synchronous>, transform_indices = @transform_1, window_bounds = array<i64: 32, 32>}, {transform_indices = @transform_2, window_bounds = array<i64: 1, 8, 32>}]} {
    %c0 = arith.constant 0 : index
    %c0_0 = arith.constant 0 : index
    %c0_1 = arith.constant 0 : index
    %0 = vector.load %arg2[%c0, %c0_0, %c0_1] : memref<1x8x32xbf16, #tpu.memory_space<vmem>>, vector<1x8x32xbf16>
    %1 = vector.shape_cast %0 : vector<1x8x32xbf16> to vector<8x32xbf16>
    %c0_2 = arith.constant 0 : index
    %c0_3 = arith.constant 0 : index
    %2 = vector.load %arg3[%c0_2, %c0_3] : memref<32x32xbf16, #tpu.memory_space<vmem>>, vector<32x32xbf16>
    %cst = arith.constant dense<0.000000e+00> : vector<8x32xf32>
    %3 = tpu.matmul %1, %2, %cst {dimension_numbers = #tpu.dot_dimension_numbers<[1], [0], [0], [1], [0, 0, 1, 1], [], []>} : vector<8x32xbf16>, vector<32x32xbf16>, vector<8x32xf32> -> vector<8x32xf32>
    %4 = arith.truncf %3 : vector<8x32xf32> to vector<8x32xbf16>
    %c0_4 = arith.constant 0 : index
    %c0_5 = arith.constant 0 : index
    %c0_6 = arith.constant 0 : index
    %5 = vector.load %arg4[%c0_4, %c0_5, %c0_6] : memref<1x8x32xbf16, #tpu.memory_space<vmem>>, vector<1x8x32xbf16>
    %6 = vector.shape_cast %5 : vector<1x8x32xbf16> to vector<8x32xbf16>
    %7 = vector.shape_cast %4 : vector<8x32xbf16> to vector<1x8x32xbf16>
    tpu.vector_store %arg4[%c0_4, %c0_5, %c0_6], %7 {strides = array<i32>} : memref<1x8x32xbf16, #tpu.memory_space<vmem>>, vector<1x8x32xbf16>,
    return
  }
  func.func @transform_0(%arg0: i32, %arg1: i32) -> (i32, i32, i32) {
    %c0_i32 = arith.constant 0 : i32
    %c0_i32_0 = arith.constant 0 : i32
    return %arg0, %arg1, %c0_i32 : i32, i32, i32
  }
  func.func @transform_1(%arg0: i32, %arg1: i32) -> (i32, i32) {
    %c0_i32 = arith.constant 0 : i32
    %c0_i32_0 = arith.constant 0 : i32
    %c0_i32_1 = arith.constant 0 : i32
    return %c0_i32, %c0_i32_0 : i32, i32
  }
  func.func @transform_2(%arg0: i32, %arg1: i32) -> (i32, i32, i32) {
    %c0_i32 = arith.constant 0 : i32
    %c0_i32_0 = arith.constant 0 : i32
    return %arg0, %arg1, %c0_i32 : i32, i32, i32
  }
}

</mosaic_0001>

<llo_original>
// kernel: tpu_custom_call.1
$region0: #{tpu_custom_call.1}
  #allocation0 [shape = 'u32[]', space=smem, size = 0x4, offset = 0x4, fixed_abs, tag = 'smem constant byte address 0x4 - core index']
  #allocation1 [shape = 'u32[144,128]{1,0:T(1,128)}', space=vmem, size = 0x12000, scoped, tag = 'internal scratch']
  %s0 = inlined_call_operand.hbm [shape: bf16[2,8,32], index: 0, kind: input, shape index: {}]
  %s1 = inlined_call_operand.hbm [shape: bf16[32,32], index: 1, kind: input, shape index: {}]
  %s2 = inlined_call_operand.hbm [shape: bf16[2,8,32], index: 2, kind: output, shape index: {}]
  %s3 = sld [smem:[#allocation0]]
  $region49: #{tpu_custom_call.1} parent=0
    _
  %s5 = ssub.s32 1, %s3
  %s6 = scalar_select 0, %s5, %s3
  $region1: #{tpu_custom_call.1} parent=0
    #allocation2 [shape = 'u8[4096]{0}', space=vmem, size = 0x1000, scoped, tag = 'input window, operand 0']
    #allocation3 [shape = 's32[2]{0}', space=sflag, size = 0x8, scoped, tag = 'scoped memory for tpu_custom_call.1']
    #allocation4 [shape = 's32[2]{0}', space=sflag, size = 0x8, scoped, tag = 'scoped memory for tpu_custom_call.1']
    #allocation5 [shape = 'u8[8192]{0}', space=vmem, size = 0x2000, scoped, tag = 'input window, operand 1, single buffered']
    #allocation6 [shape = 's32[1]{0}', space=sflag, size = 0x4, scoped, tag = 'scoped memory for tpu_custom_call.1']
    #allocation7 [shape = 'u8[4096]{0}', space=vmem, size = 0x1000, scoped, tag = 'output window, operand 0']
    %7 = vsyncpa [#allocation3], 0
    %s8 = scalar_lea.sflag [#allocation3], 1
    %9 = vsyncpa %s8, 0
    %10 = vsyncpa [#allocation6], 0
    %11 = vsyncpa [#allocation4], 0
    %s12 = scalar_lea.sflag [#allocation4], 1
    %13 = vsyncpa %s12, 0
    loop: start=0, step=1, limit=4
    $region2: #{tpu_custom_call.1} parent=1 // loop_pre_header
      _
    $region3: #{tpu_custom_call.1} parent=1 // loop_header
      %s15 = sphi 0, %s19
      %p16 = scmp.ge.s32.totalorder %s15, 4
      %s22 = sphi 0, %s34
      %s23 = sphi 0, %s30
      %s24 = sphi 0, %s22
      %s25 = sphi 0, %s23
      %s26 = sphi 0, %s24
      %s27 = sphi 0, %s25
      %s39 = sphi 0, %s41
      %s42 = sphi 0, %s39
      %s43 = sphi 0, %s42
      %s59 = sphi 0, %s43
      %s63 = sphi 0, %s63
      %s65 = sphi 0, %s63
      %s66 = sphi 0, %s65
      %s80 = sphi 0, %s66
      %s88 = sphi 0, %s90
      %s91 = sphi 0, %s88
      %s92 = sphi 0, %s91
      %s108 = sphi 0, %s92
    $region4: #{tpu_custom_call.1} parent=1 // loop_header_branch
      %18 = sbr.rel (%p16) target = $region8
    $region5: #{tpu_custom_call.1} parent=1 // loop_body
      %s20 = ssub.s32 %s15, 1
      %s21 = ssub.s32 %s15, 2
      %s28 = sadd.s32 1, %s23
      %p29 = scmp.ge.s32.totalorder %s28, 1
      %s30 = scalar_select %p29, 0, %s28
      %s31 = sadd.s32 1, %s22
      %s32 = scalar_select %p29, %s31, %s22
      %p33 = scmp.ge.s32.totalorder %s32, 2
      %s34 = scalar_select %p33, 0, %s32
      %s35 = ssub.s32 %s22, %s34
      %s36 = ssub.s32 %s23, %s30
      %s37 = sor.u32 %s35, %s36
      %p38 = scmp.eq.s32.totalorder %s37, 0
      %s40 = sadd.s32 %s39, 1
      %s41 = scalar_select %p38, %s39, %s40
      %p44 = pneg %p38
      %p45 = scmp.eq.s32.totalorder %s15, 1
      %p46 = por %p44, %p45
      %p47 = scmp.ne.s32.totalorder %s39, %s42
      %p48 = scmp.eq.s32.totalorder %s15, 0
      %p49 = por %p47, %p48
      %p50 = scmp.ne.s32.totalorder %s39, %s42
      %p51 = scmp.eq.s32.totalorder %s20, 1
      %p52 = por %p50, %p51
      %p53 = scmp.ne.s32.totalorder %s42, %s43
      %p54 = scmp.eq.s32.totalorder %s20, 0
      %p55 = por %p53, %p54
      %p56 = scmp.ne.s32.totalorder %s42, %s43
      %p57 = scmp.eq.s32.totalorder %s21, 1
      %p58 = por %p56, %p57
      %p60 = scmp.ne.s32.totalorder %s43, %s59
      %p61 = scmp.eq.s32.totalorder %s21, 0
      %p62 = por %p60, %p61
      %s64 = sadd.s32 %s63, 1
      %p67 = scmp.eq.s32.totalorder %s15, 1
      %p68 = scmp.ne.s32.totalorder %s63, %s65
      %p69 = scmp.eq.s32.totalorder %s15, 0
      %p70 = por %p68, %p69
      %p71 = scmp.ne.s32.totalorder %s63, %s65
      %p72 = scmp.eq.s32.totalorder %s20, 1
      %p73 = por %p71, %p72
      %p74 = scmp.ne.s32.totalorder %s65, %s66
      %p75 = scmp.eq.s32.totalorder %s20, 0
      %p76 = por %p74, %p75
      %p77 = scmp.ne.s32.totalorder %s65, %s66
      %p78 = scmp.eq.s32.totalorder %s21, 1
      %p79 = por %p77, %p78
      %p81 = scmp.ne.s32.totalorder %s66, %s80
      %p82 = scmp.eq.s32.totalorder %s21, 0
      %p83 = por %p81, %p82
      %s84 = ssub.s32 %s22, %s34
      %s85 = ssub.s32 %s23, %s30
      %s86 = sor.u32 %s84, %s85
      %p87 = scmp.eq.s32.totalorder %s86, 0
      %s89 = sadd.s32 %s88, 1
      %s90 = scalar_select %p87, %s88, %s89
      %p93 = pneg %p87
      %p94 = scmp.eq.s32.totalorder %s15, 1
      %p95 = por %p93, %p94
      %p96 = scmp.ne.s32.totalorder %s88, %s91
      %p97 = scmp.eq.s32.totalorder %s15, 0
      %p98 = por %p96, %p97
      %p99 = scmp.ne.s32.totalorder %s88, %s91
      %p100 = scmp.eq.s32.totalorder %s20, 1
      %p101 = por %p99, %p100
      %p102 = scmp.ne.s32.totalorder %s91, %s92
      %p103 = scmp.eq.s32.totalorder %s20, 0
      %p104 = por %p102, %p103
      %p105 = scmp.ne.s32.totalorder %s91, %s92
      %p106 = scmp.eq.s32.totalorder %s21, 1
      %p107 = por %p105, %p106
      %p109 = scmp.ne.s32.totalorder %s92, %s108
      %p110 = scmp.eq.s32.totalorder %s21, 0
      %p111 = por %p109, %p110
      %p112 = scmp.le.s32.totalorder 1, %s15
      %p113 = scmp.lt.s32.totalorder %s15, 3
      %p114 = pnand %p112, %p113
      %p115 = pneg %p114
      // Predicated region
      $region9: #{tpu_custom_call.1} parent=5 // pred_check
        _
      $region10: #{tpu_custom_call.1} parent=5 // pred_check_branch
        %117 = sbr.rel (%p114) target = $region12
      $region11: #{tpu_custom_call.1} parent=5 // pred_region
        %s118 = ssub.s32 %s15, 1
        // Predicated region
        $region13: #{tpu_custom_call.1} parent=11 // pred_check
          %p119 = pneg %p76
        $region14: #{tpu_custom_call.1} parent=11 // pred_check_branch
          %121 = sbr.rel (%p119) target = $region16
        $region15: #{tpu_custom_call.1} parent=11 // pred_region
          %s123 = ssub.s32 256, 256
          %124 = vsyncadd [#allocation6], %s123
          %s125 = sshll.u32 [#allocation5], 4
          %s126 = int_to_ptr.vmem [resolvable:$true] %s125
          %131 = dma.hbm_to_vmem [thread:$0]  %s1, 256, %s126, [#allocation6], 64, 64, 4
        $region16: #{tpu_custom_call.1} parent=11 // pred_fallthru
          _
      $region12: #{tpu_custom_call.1} parent=5 // pred_fallthru
        _
      %p132 = scmp.lt.s32.totalorder %s15, 2
      // Predicated region
      $region17: #{tpu_custom_call.1} parent=5 // pred_check
        %p133 = pneg %p132
      $region18: #{tpu_custom_call.1} parent=5 // pred_check_branch
        %135 = sbr.rel (%p133) target = $region20
      $region19: #{tpu_custom_call.1} parent=5 // pred_region
        // Predicated region
        $region21: #{tpu_custom_call.1} parent=19 // pred_check
          %p136 = pneg %p49
        $region22: #{tpu_custom_call.1} parent=19 // pred_check_branch
          %138 = sbr.rel (%p136) target = $region24
        $region23: #{tpu_custom_call.1} parent=19 // pred_region
          %s139 = sand.u32 %s39, 1
          %s140 = scalar_lea.sflag [#allocation3], %s139
          %s141 = sand.u32 %s39, 1
          %s142 = smul.addr %s141, 4
          %s143 = scalar_lea.vmem [#allocation2], %s142
          %s145 = ssub.s32 64, 64
          %146 = vsyncadd %s140, %s145
          %s147 = sadd.s32 %s23, %s22
          %s148 = smul.addr %s147, 64
          %s149 = scalar_lea.hbm %s0, %s148
          %s151 = sshll.u32 %s143, 4
          %s152 = int_to_ptr.vmem [resolvable:$true] %s151
          %154 = dma.hbm_to_vmem [thread:$0]  %s149, 64, %s152, %s140
        $region24: #{tpu_custom_call.1} parent=19 // pred_fallthru
          _
      $region20: #{tpu_custom_call.1} parent=5 // pred_fallthru
        _
      %p155 = scmp.le.s32.totalorder 1, %s15
      %p156 = scmp.lt.s32.totalorder %s15, 3
      %p157 = pnand %p155, %p156
      %p158 = pneg %p157
      // Predicated region
      $region25: #{tpu_custom_call.1} parent=5 // pred_check
        _
      $region26: #{tpu_custom_call.1} parent=5 // pred_check_branch
        %160 = sbr.rel (%p157) target = $region28
      $region27: #{tpu_custom_call.1} parent=5 // pred_region
        %s161 = ssub.s32 %s15, 1
        %s162 = sand.u32 %s42, 1
        %s163 = scalar_lea.sflag [#allocation3], %s162
        %s164 = sand.u32 %s42, 1
        %s165 = smul.addr %s164, 4
        %s166 = scalar_lea.vmem [#allocation2], %s165
        // Predicated region
        $region29: #{tpu_custom_call.1} parent=27 // pred_check
          %p167 = pneg %p55
        $region30: #{tpu_custom_call.1} parent=27 // pred_check_branch
          %169 = sbr.rel (%p167) target = $region32
        $region31: #{tpu_custom_call.1} parent=27 // pred_region
          %170 = dma.done %s163, 64
        $region32: #{tpu_custom_call.1} parent=27 // pred_fallthru
          _
        // Predicated region
        $region33: #{tpu_custom_call.1} parent=27 // pred_check
          %p171 = pneg %p76
        $region34: #{tpu_custom_call.1} parent=27 // pred_check_branch
          %173 = sbr.rel (%p171) target = $region36
        $region35: #{tpu_custom_call.1} parent=27 // pred_region
          %174 = dma.done [#allocation6], 256
        $region36: #{tpu_custom_call.1} parent=27 // pred_fallthru
          _
        %s175 = sand.u32 %s42, 1
        %s176 = scalar_lea.sflag [#allocation3], %s175
        %s177 = sand.u32 %s42, 1
        %s178 = smul.addr %s177, 4
        %s179 = scalar_lea.vmem [#allocation2], %s178
        %p180 = pneg %p55
        %p181 = pneg %p52
        %p182 = pneg %p76
        %p183 = pneg %p73
        %p184 = pneg %p104
        %p185 = pneg %p101
        %s186 = sand.u32 %s91, 1
        %s187 = scalar_lea.sflag [#allocation4], %s186
        %s188 = sand.u32 %s91, 1
        %s189 = smul.addr %s188, 4
        %s190 = scalar_lea.vmem [#allocation7], %s189
        %v192 = vld [vmem:[%s166] sm:$0xf]
        %v193 = vld [vmem:[#allocation5] sm:$0xf]
        %v194 = vld [vmem:[#allocation5 + $0x4] sm:$0xf]
        %v195 = vld [vmem:[#allocation5 + $0x8] sm:$0xf]
        %v196 = vld [vmem:[#allocation5 + $0xc] sm:$0xf]
        %v201 = vunpack.c.l.b16 %v193
        %v202 = vunpack.c.l.b16 %v194
        %v203 = vunpack.c.l.b16 %v195
        %v204 = vunpack.c.l.b16 %v196
        %v205 = vpack.c.b16 %v202, %v201
        %v206 = vpack.c.b16 %v204, %v203
        %vm209 = vcmask 261120
        %v211 = vsel %vm209, %v192, 0
        %213 = vmatprep.subr.bf16.mxu0 0
        %214 = vmatpush1.bf16.msra.mxu0 %v205
        %215 = vmatprep.subr.bf16.mxu0 0
        %216 = vmatpush1.bf16.msra.mxu0 %v206
        %217 = vmatprep.subr.bf16.mxu0 0
        %218 = vmatpush1.bf16.msra.mxu0 0
        %219 = vmatprep.subr.bf16.mxu0 0
        %220 = vmatpush1.bf16.msra.mxu0 0
        %221 = vmatprep.subr.bf16.mxu0 0
        %222 = vmatpush1.bf16.msra.mxu0 0
        %223 = vmatprep.subr.bf16.mxu0 0
        %224 = vmatpush1.bf16.msra.mxu0 0
        %225 = vmatprep.subr.bf16.mxu0 0
        %226 = vmatpush1.bf16.msra.mxu0 0
        %227 = vmatprep.subr.bf16.mxu0 0
        %228 = vmatpush1.bf16.msra.mxu0 0
        %229 = vmatprep.subr.bf16.mxu0 0
        %230 = vmatpush1.bf16.msra.mxu0 0
        %231 = vmatprep.subr.bf16.mxu0 0
        %232 = vmatpush1.bf16.msra.mxu0 0
        %233 = vmatprep.subr.bf16.mxu0 0
        %234 = vmatpush1.bf16.msra.mxu0 0
        %235 = vmatprep.subr.bf16.mxu0 0
        %236 = vmatpush1.bf16.msra.mxu0 0
        %237 = vmatprep.subr.bf16.mxu0 0
        %238 = vmatpush1.bf16.msra.mxu0 0
        %239 = vmatprep.subr.bf16.mxu0 0
        %240 = vmatpush1.bf16.msra.mxu0 0
        %241 = vmatprep.subr.bf16.mxu0 0
        %242 = vmatpush1.bf16.msra.mxu0 0
        %243 = vmatprep.subr.bf16.mxu0 0
        %244 = vmatpush1.bf16.msra.mxu0 0
        %245 = vmatprep.mubr.bf16.mxu0 0
        %246 = vmatmul.mubr.bf16.gmra.mrb[0].mxu0 %v211
        %v247 = vpop.f32.mrb[0].mxu0
        %v248 = vadd.f32 0.0, %v247
        %v249 = vpop.f32.mrb[0].mxu0
        %v250 = vpop.f32.mrb[0].mxu0
        %v251 = vpop.f32.mrb[0].mxu0
        %252 = vdwg.mxu0
        %v253 = vpack.c.bf16 %v248, %v248
        %vm254 = vcmask 257024
        %255 = vst.msk [vmem:[%s190] sm:$0xf] %vm254, %v253
        %s256 = sand.u32 %s91, 1
        %s257 = scalar_lea.sflag [#allocation4], %s256
        %s258 = sand.u32 %s91, 1
        %s259 = smul.addr %s258, 4
        %s260 = scalar_lea.vmem [#allocation7], %s259
        // Predicated region
        $region37: #{tpu_custom_call.1} parent=27 // pred_check
          %p261 = pneg %p101
        $region38: #{tpu_custom_call.1} parent=27 // pred_check_branch
          %263 = sbr.rel (%p261) target = $region40
        $region39: #{tpu_custom_call.1} parent=27 // pred_region
          %s265 = ssub.s32 64, 64
          %266 = vsyncadd %s257, %s265
          %s267 = sadd.s32 %s25, %s24
          %s268 = smul.addr %s267, 64
          %s269 = scalar_lea.hbm %s2, %s268
          %s271 = sshll.u32 %s260, 4
          %s272 = int_to_ptr.vmem [resolvable:$true] %s271
          %274 = dma.vmem_to_hbm [thread:$0]  %s272, 64, %s269, %s257
        $region40: #{tpu_custom_call.1} parent=27 // pred_fallthru
          _
      $region28: #{tpu_custom_call.1} parent=5 // pred_fallthru
        _
      %p275 = scmp.le.s32.totalorder 2, %s15
      // Predicated region
      $region41: #{tpu_custom_call.1} parent=5 // pred_check
        %p276 = pneg %p275
      $region42: #{tpu_custom_call.1} parent=5 // pred_check_branch
        %278 = sbr.rel (%p276) target = $region44
      $region43: #{tpu_custom_call.1} parent=5 // pred_region
        %s279 = ssub.s32 %s15, 2
        // Predicated region
        $region45: #{tpu_custom_call.1} parent=43 // pred_check
          %p280 = pneg %p107
        $region46: #{tpu_custom_call.1} parent=43 // pred_check_branch
          %282 = sbr.rel (%p280) target = $region48
        $region47: #{tpu_custom_call.1} parent=43 // pred_region
          %s283 = sand.u32 %s92, 1
          %s284 = scalar_lea.sflag [#allocation4], %s283
          %s285 = sand.u32 %s92, 1
          %s286 = smul.addr %s285, 4
          %s287 = scalar_lea.vmem [#allocation7], %s286
          %288 = dma.done %s284, 64
        $region48: #{tpu_custom_call.1} parent=43 // pred_fallthru
          _
      $region44: #{tpu_custom_call.1} parent=5 // pred_fallthru
        _
    $region6: #{tpu_custom_call.1} parent=1 // loop_footer
      %s19 = sadd.s32 1, %s15
    $region7: #{tpu_custom_call.1} parent=1 // loop_footer_branch
      %14 = sbr.rel target = $region3
    $region8: #{tpu_custom_call.1} parent=1 // loop_exit
      _
    %289 = vsyncpa [#allocation3], 1
    %s290 = scalar_lea.sflag [#allocation3], 1
    %291 = vsyncpa %s290, 1
    %292 = vsyncpa [#allocation6], 1
    %293 = vsyncpa [#allocation4], 1
    %s294 = scalar_lea.sflag [#allocation4], 1
    %295 = vsyncpa %s294, 1

</llo_original>
